<compile_context>
chip_gen: v7x
topology: tpu7x:2x2x1
jax: 0.10.0
libtpu: 0.0.40
codegen_flags: <defaults>
</compile_context>

<pallas_src>
import functools

import numpy as np
import jax
import jax.numpy as jnp
from jax import lax
from jax.experimental import pallas as pl
from jax.experimental.pallas import tpu as pltpu

EPS = 1e-5                    # PyTorch BatchNorm2d default eps
MATMUL_DTYPE = jnp.bfloat16   # MXU-operand / input-DMA dtype (jnp.float32 for bit-tight checks)


def decoder_kernel(x_ref, w1_ref, b1_ref, wtap_ref, b2_ref, w3_ref, b3_ref,
                   mask_ref, out_ref, *, hw, w, mm_dtype):
    f32 = jnp.float32

    # ---- conv1 (1x1, BN1 folded) + ReLU : one MXU matmul --------------------
    h1 = jnp.dot(w1_ref[...], x_ref[...], preferred_element_type=f32)    # (C4, HW)
    h1 = jnp.maximum(h1 + b1_ref[...], 0.0)

    # ---- 4 shifted copies of h1 (zero outside the image) --------------------
    # Flat index i = m*W + n.  pltpu.roll executes on the XLU slot (otherwise
    # idle here); wrap-around values are killed by the precomputed masks
    # (f32 VPU math).  shift = HW - k  <=>  value at flat index i + k.
    cm = mask_ref[0:1, :]                                       # zero where n == W-1
    rm = mask_ref[1:2, :]                                       # zero where m == H-1
    sb = pltpu.roll(h1, shift=hw - w, axis=1) * rm              # value at (m+1, n)
    sc = pltpu.roll(h1, shift=hw - 1, axis=1) * cm              # value at (m,   n+1)
    sd = pltpu.roll(h1, shift=hw - w - 1, axis=1) * (cm * rm)   # value at (m+1, n+1)
    stacked = jnp.concatenate([h1, sb, sc, sd], axis=0).astype(mm_dtype)  # (4*C4, HW)

    # ---- all 4 deconv sub-pixel phases (+ BN2 folded) in ONE matmul + ReLU ---
    h2 = jnp.dot(wtap_ref[...], stacked, preferred_element_type=f32)      # (4*C4, HW)
    h2 = jnp.maximum(h2 + b2_ref[...], 0.0)

    # ---- conv3 (1x1, BN3 folded) for all phases via block-diagonal weight ---
    o = jnp.dot(w3_ref[...], h2.astype(mm_dtype), preferred_element_type=f32)  # (4*Cout, HW)
    out_ref[...] = jnp.maximum(o + b3_ref[...], 0.0).astype(out_ref.dtype)      # single wide store


def decoder_block(x, params):
    """x: (N, Cin, H, W) f32. Returns (N, n_filters, 2H, 2W) f32."""
    (w1, b1, g1, be1, m1, v1,
     w2, b2, g2, be2, m2, v2,
     w3, b3, g3, be3, m3, v3) = params

    N, Cin, H, W = x.shape
    C4 = w1.shape[0]
    Cout = w3.shape[0]
    HW = H * W
    f32 = jnp.float32
    mmd = MATMUL_DTYPE

    # ---- fold BatchNorm (inference) into the convolutions, host/XLA side ----
    s1 = g1 / jnp.sqrt(v1 + EPS)
    w1f = (w1[:, :, 0, 0] * s1[:, None]).astype(f32)            # (C4, Cin)
    b1f = ((b1 - m1) * s1 + be1).astype(f32)[:, None]           # (C4, 1)

    s2 = g2 / jnp.sqrt(v2 + EPS)
    # tt[ky, kx, oc, ic] = w2[ic, oc, ky, kx] * s2[oc]   (ConvTranspose2d weight is (in, out, kH, kW))
    tt = (jnp.transpose(w2, (2, 3, 1, 0)) * s2[None, None, :, None]).astype(f32)
    b2f = ((b2 - m2) * s2 + be2).astype(f32)[:, None]           # (C4, 1)

    s3 = g3 / jnp.sqrt(v3 + EPS)
    w3f = (w3[:, :, 0, 0] * s3[:, None]).astype(f32)            # (Cout, C4)
    b3f = ((b3 - m3) * s3 + be3).astype(f32)[:, None]           # (Cout, 1)

    # ---- single fused phase-tap matrix (4*C4, 4*C4) --------------------------
    # Output pixel (2m+py, 2n+px), phase p = 2*py+px, receives
    #   sum_ic w2[ic, oc, ky, kx] * h1[ic, iy, ix]
    # with 2*iy - 1 + ky = 2m+py and 2*ix - 1 + kx = 2n+px.  The 4 shifted
    # variants are v=0:(m,n)  v=1:(m+1,n)  v=2:(m,n+1)  v=3:(m+1,n+1).
    taps = jnp.zeros((4, 4, C4, C4), f32)

    def put(t, p, v, ky, kx):
        return t.at[p, v].set(tt[ky, kx])

    taps = put(taps, 0, 0, 1, 1)                                # (even, even): A
    taps = put(taps, 1, 0, 1, 2)                                # (even, odd) : A
    taps = put(taps, 1, 2, 1, 0)                                #               C = (m, n+1)
    taps = put(taps, 2, 0, 2, 1)                                # (odd, even) : A
    taps = put(taps, 2, 1, 0, 1)                                #               B = (m+1, n)
    taps = put(taps, 3, 0, 2, 2)                                # (odd, odd)  : A
    taps = put(taps, 3, 1, 0, 2)                                #               B
    taps = put(taps, 3, 2, 2, 0)                                #               C
    taps = put(taps, 3, 3, 0, 0)                                #               D = (m+1, n+1)
    # W_tap[p*C4 + oc, v*C4 + ic] = taps[p, v, oc, ic]
    wtap = jnp.transpose(taps, (0, 2, 1, 3)).reshape(4 * C4, 4 * C4).astype(mmd)
    b2t = jnp.tile(b2f, (4, 1))                                 # (4*C4, 1)

    # block-diagonal conv3 applied to the stacked phases, and tiled bias
    w3b = jnp.kron(jnp.eye(4, dtype=f32), w3f).astype(mmd)      # (4*Cout, 4*C4)
    b3t = jnp.tile(b3f, (4, 1))                                 # (4*Cout, 1)

    # boundary masks for the rolled (shifted) copies
    idx = jnp.arange(HW)
    cmask = ((idx % W) != (W - 1)).astype(f32)                  # zero last image column
    rmask = (idx < (HW - W)).astype(f32)                        # zero last image row
    masks = jnp.stack([cmask, rmask], axis=0)                   # (2, HW)

    # bf16 input halves the input-side HBM DMA; accumulation stays f32.
    xq = x.reshape(N, Cin, HW).astype(mmd)
    w1q = w1f.astype(mmd)

    kernel = functools.partial(decoder_kernel, hw=HW, w=W, mm_dtype=mmd)

    # explicit VMEM budget (double-buffered in/out blocks + intermediates + slack)
    itemsize_in = jnp.dtype(mmd).itemsize
    block_bytes = (itemsize_in * Cin * HW          # input block
                   + 4 * 4 * Cout * HW             # f32 output block
                   + 4 * 12 * C4 * HW)             # f32 intermediates (h1, shifts, stacked, h2)
    vmem_limit = int(min(64 * 2 ** 20, max(16 * 2 ** 20, 8 * block_bytes)))

    out2d = pl.pallas_call(
        kernel,
        out_shape=jax.ShapeDtypeStruct((N, 4 * Cout, HW), f32),
        grid=(N,),
        in_specs=[
            pl.BlockSpec((None, Cin, HW), lambda n: (n, 0, 0)),       # x (one batch element)
            pl.BlockSpec((C4, Cin), lambda n: (0, 0)),                # conv1 weight (BN folded)
            pl.BlockSpec((C4, 1), lambda n: (0, 0)),                  # conv1 bias
            pl.BlockSpec((4 * C4, 4 * C4), lambda n: (0, 0)),         # fused deconv phase-tap matrix
            pl.BlockSpec((4 * C4, 1), lambda n: (0, 0)),              # deconv bias (tiled per phase)
            pl.BlockSpec((4 * Cout, 4 * C4), lambda n: (0, 0)),       # block-diagonal conv3 weight
            pl.BlockSpec((4 * Cout, 1), lambda n: (0, 0)),            # conv3 bias (tiled per phase)
            pl.BlockSpec((2, HW), lambda n: (0, 0)),                  # column / row boundary masks
        ],
        out_specs=pl.BlockSpec((None, 4 * Cout, HW), lambda n: (n, 0, 0)),
        compiler_params=pltpu.CompilerParams(
            dimension_semantics=("parallel",),
            vmem_limit_bytes=vmem_limit),
    )(xq, w1q, b1f, wtap, b2t, w3b, b3t, masks)

    # Interleave the 4 sub-pixel phases -> (N, Cout, 2H, 2W).  Pure XLA layout
    # work; a Pallas consumer could instead read the (N, 4*Cout, HW) phase
    # layout directly and fold this interleave into its index_map.
    out = out2d.reshape(N, 2, 2, Cout, H, W)
    out = jnp.transpose(out, (0, 3, 4, 1, 5, 2))
    return out.reshape(N, Cout, 2 * H, 2 * W)


def ref_forward(x, params):
    """Pure-JAX reference of DecoderBlock.forward (inference-mode BatchNorm)."""
    (w1, b1, g1, be1, m1, v1,
     w2, b2, g2, be2, m2, v2,
     w3, b3, g3, be3, m3, v3) = params
    hp = lax.Precision.HIGHEST

    def bn(y, g, be, m, v):
        s = g / jnp.sqrt(v + EPS)
        return y * s[None, :, None, None] + (be - m * s)[None, :, None, None]

    h = jnp.einsum('oi,nihw->nohw', w1[:, :, 0, 0], x, precision=hp) + b1[None, :, None, None]
    h = jnp.maximum(bn(h, g1, be1, m1, v1), 0.0)

    # ConvTranspose2d(k=3, s=2, p=1, output_padding=1) == lhs-dilated conv with
    # the spatially flipped, (in,out)-transposed kernel and padding (1, 2).
    wk = jnp.transpose(w2[:, :, ::-1, ::-1], (1, 0, 2, 3))      # (O, I, 3, 3)
    h = lax.conv_general_dilated(
        h, wk, window_strides=(1, 1), padding=((1, 2), (1, 2)),
        lhs_dilation=(2, 2), rhs_dilation=(1, 1),
        dimension_numbers=('NCHW', 'OIHW', 'NCHW'), precision=hp)
    h = h + b2[None, :, None, None]
    h = jnp.maximum(bn(h, g2, be2, m2, v2), 0.0)

    h = jnp.einsum('oi,nihw->nohw', w3[:, :, 0, 0], h, precision=hp) + b3[None, :, None, None]
    h = jnp.maximum(bn(h, g3, be3, m3, v3), 0.0)
    return h


if __name__ == "__main__":
    N, Cin, H, W = 2, 16, 16, 16
    n_filters = 8
    C4 = Cin // 4

    key = jax.random.PRNGKey(0)
    ks = jax.random.split(key, 20)

    def normal(k, shape, scale=1.0):
        return scale * jax.random.normal(k, shape, jnp.float32)

    x = normal(ks[0], (N, Cin, H, W))

    w1 = normal(ks[1], (C4, Cin, 1, 1), 0.3)          # Conv2d(Cin, Cin//4, 1)
    b1 = normal(ks[2], (C4,), 0.1)
    g1 = 1.0 + 0.1 * jax.random.normal(ks[3], (C4,), jnp.float32)
    be1 = normal(ks[4], (C4,), 0.1)
    m1 = normal(ks[5], (C4,), 0.1)
    v1 = jax.random.uniform(ks[6], (C4,), jnp.float32, 0.5, 1.5)

    w2 = normal(ks[7], (C4, C4, 3, 3), 0.3)           # ConvTranspose2d weight (in, out, 3, 3)
    b2 = normal(ks[8], (C4,), 0.1)
    g2 = 1.0 + 0.1 * jax.random.normal(ks[9], (C4,), jnp.float32)
    be2 = normal(ks[10], (C4,), 0.1)
    m2 = normal(ks[11], (C4,), 0.1)
    v2 = jax.random.uniform(ks[12], (C4,), jnp.float32, 0.5, 1.5)

    w3 = normal(ks[13], (n_filters, C4, 1, 1), 0.3)   # Conv2d(Cin//4, n_filters, 1)
    b3 = normal(ks[14], (n_filters,), 0.1)
    g3 = 1.0 + 0.1 * jax.random.normal(ks[15], (n_filters,), jnp.float32)
    be3 = normal(ks[16], (n_filters,), 0.1)
    m3 = normal(ks[17], (n_filters,), 0.1)
    v3 = jax.random.uniform(ks[18], (n_filters,), jnp.float32, 0.5, 1.5)

    params = (w1, b1, g1, be1, m1, v1,
              w2, b2, g2, be2, m2, v2,
              w3, b3, g3, be3, m3, v3)

    out = decoder_block(x, params)
    out = jax.block_until_ready(out)

    ref = ref_forward(x, params)
    # bf16 matmul operands (f32 accumulate) -> relaxed tolerance, per review.
    tol = 3e-2 if MATMUL_DTYPE == jnp.bfloat16 else 5e-4
    np.testing.assert_allclose(np.asarray(out), np.asarray(ref), rtol=tol, atol=tol)
    print("KERNEL_OK")
</pallas_src>

<mosaic_0001>
module attributes {stable_mosaic.version = 11 : i64} {
  func.func @decoder_kernel(%arg0: i32, %arg1: memref<1x16x256xbf16, #tpu.memory_space<vmem>>, %arg2: memref<4x16xbf16, #tpu.memory_space<vmem>>, %arg3: memref<4x1xf32, #tpu.memory_space<vmem>>, %arg4: memref<16x16xbf16, #tpu.memory_space<vmem>>, %arg5: memref<16x1xf32, #tpu.memory_space<vmem>>, %arg6: memref<32x16xbf16, #tpu.memory_space<vmem>>, %arg7: memref<32x1xf32, #tpu.memory_space<vmem>>, %arg8: memref<2x256xf32, #tpu.memory_space<vmem>>, %arg9: memref<1x32x256xf32, #tpu.memory_space<vmem>>) attributes {dimension_semantics = [#tpu.dimension_semantics<parallel>], iteration_bounds = array<i64: 2>, scalar_prefetch = 0 : i64, scratch_operands = 0 : i64, tpu.core_type = #tpu.core_type<tc>, window_params = [{transform_indices = @transform_0, window_bounds = array<i64: 1, 16, 256>}, {pipeline_mode = #tpu.pipeline_mode<synchronous>, transform_indices = @transform_1, window_bounds = array<i64: 4, 16>}, {pipeline_mode = #tpu.pipeline_mode<synchronous>, transform_indices = @transform_2, window_bounds = array<i64: 4, 1>}, {pipeline_mode = #tpu.pipeline_mode<synchronous>, transform_indices = @transform_3, window_bounds = array<i64: 16, 16>}, {pipeline_mode = #tpu.pipeline_mode<synchronous>, transform_indices = @transform_4, window_bounds = array<i64: 16, 1>}, {pipeline_mode = #tpu.pipeline_mode<synchronous>, transform_indices = @transform_5, window_bounds = array<i64: 32, 16>}, {pipeline_mode = #tpu.pipeline_mode<synchronous>, transform_indices = @transform_6, window_bounds = array<i64: 32, 1>}, {pipeline_mode = #tpu.pipeline_mode<synchronous>, transform_indices = @transform_7, window_bounds = array<i64: 2, 256>}, {transform_indices = @transform_8, window_bounds = array<i64: 1, 32, 256>}]} {
    %c0 = arith.constant 0 : index
    %c0_0 = arith.constant 0 : index
    %0 = vector.load %arg2[%c0, %c0_0] : memref<4x16xbf16, #tpu.memory_space<vmem>>, vector<4x16xbf16>
    %c0_1 = arith.constant 0 : index
    %c0_2 = arith.constant 0 : index
    %c0_3 = arith.constant 0 : index
    %1 = vector.load %arg1[%c0_1, %c0_2, %c0_3] : memref<1x16x256xbf16, #tpu.memory_space<vmem>>, vector<1x16x256xbf16>
    %2 = vector.shape_cast %1 : vector<1x16x256xbf16> to vector<16x256xbf16>
    %cst = arith.constant dense<0.000000e+00> : vector<4x256xf32>
    %3 = tpu.matmul %0, %2, %cst {dimension_numbers = #tpu.dot_dimension_numbers<[1], [0], [0], [1], [0, 0, 1, 1], [], []>} : vector<4x16xbf16>, vector<16x256xbf16>, vector<4x256xf32> -> vector<4x256xf32>
    %c0_4 = arith.constant 0 : index
    %c0_5 = arith.constant 0 : index
    %4 = vector.load %arg3[%c0_4, %c0_5] : memref<4x1xf32, #tpu.memory_space<vmem>>, vector<4x1xf32>
    %5 = vector.broadcast %4 : vector<4x1xf32> to vector<4x256xf32>
    %6 = arith.addf %3, %5 : vector<4x256xf32>
    %cst_6 = arith.constant 0.000000e+00 : f32
    %7 = vector.broadcast %cst_6 : f32 to vector<4x256xf32>
    %8 = arith.maximumf %6, %7 : vector<4x256xf32>
    %c0_7 = arith.constant 0 : index
    %c0_8 = arith.constant 0 : index
    %9 = vector.load %arg8[%c0_7, %c0_8] : memref<2x256xf32, #tpu.memory_space<vmem>>, vector<1x256xf32>
    %c1 = arith.constant 1 : index
    %c0_9 = arith.constant 0 : index
    %10 = vector.load %arg8[%c1, %c0_9] : memref<2x256xf32, #tpu.memory_space<vmem>>, vector<1x256xf32>
    %c240_i32 = arith.constant 240 : i32
    %11 = tpu.dynamic_rotate %8 by %c240_i32 dim 1 : vector<4x256xf32>, i32 -> vector<4x256xf32>
    %12 = vector.broadcast %10 : vector<1x256xf32> to vector<4x256xf32>
    %13 = arith.mulf %11, %12 : vector<4x256xf32>
    %c255_i32 = arith.constant 255 : i32
    %14 = tpu.dynamic_rotate %8 by %c255_i32 dim 1 : vector<4x256xf32>, i32 -> vector<4x256xf32>
    %15 = vector.broadcast %9 : vector<1x256xf32> to vector<4x256xf32>
    %16 = arith.mulf %14, %15 : vector<4x256xf32>
    %c239_i32 = arith.constant 239 : i32
    %17 = tpu.dynamic_rotate %8 by %c239_i32 dim 1 : vector<4x256xf32>, i32 -> vector<4x256xf32>
    %18 = arith.mulf %9, %10 : vector<1x256xf32>
    %19 = vector.broadcast %18 : vector<1x256xf32> to vector<4x256xf32>
    %20 = arith.mulf %17, %19 : vector<4x256xf32>
    %21 = tpu.concatenate %8, %13, %16, %20 in 0 : vector<4x256xf32>, vector<4x256xf32>, vector<4x256xf32>, vector<4x256xf32> -> vector<16x256xf32>
    %22 = arith.truncf %21 : vector<16x256xf32> to vector<16x256xbf16>
    %c0_10 = arith.constant 0 : index
    %c0_11 = arith.constant 0 : index
    %23 = vector.load %arg4[%c0_10, %c0_11] : memref<16x16xbf16, #tpu.memory_space<vmem>>, vector<16x16xbf16>
    %cst_12 = arith.constant dense<0.000000e+00> : vector<16x256xf32>
    %24 = tpu.matmul %23, %22, %cst_12 {dimension_numbers = #tpu.dot_dimension_numbers<[1], [0], [0], [1], [0, 0, 1, 1], [], []>} : vector<16x16xbf16>, vector<16x256xbf16>, vector<16x256xf32> -> vector<16x256xf32>
    %c0_13 = arith.constant 0 : index
    %c0_14 = arith.constant 0 : index
    %25 = vector.load %arg5[%c0_13, %c0_14] : memref<16x1xf32, #tpu.memory_space<vmem>>, vector<16x1xf32>
    %26 = vector.broadcast %25 : vector<16x1xf32> to vector<16x256xf32>
    %27 = arith.addf %24, %26 : vector<16x256xf32>
    %cst_15 = arith.constant 0.000000e+00 : f32
    %28 = vector.broadcast %cst_15 : f32 to vector<16x256xf32>
    %29 = arith.maximumf %27, %28 : vector<16x256xf32>
    %c0_16 = arith.constant 0 : index
    %c0_17 = arith.constant 0 : index
    %30 = vector.load %arg6[%c0_16, %c0_17] : memref<32x16xbf16, #tpu.memory_space<vmem>>, vector<32x16xbf16>
    %31 = arith.truncf %29 : vector<16x256xf32> to vector<16x256xbf16>
    %cst_18 = arith.constant dense<0.000000e+00> : vector<32x256xf32>
    %32 = tpu.matmul %30, %31, %cst_18 {dimension_numbers = #tpu.dot_dimension_numbers<[1], [0], [0], [1], [0, 0, 1, 1], [], []>} : vector<32x16xbf16>, vector<16x256xbf16>, vector<32x256xf32> -> vector<32x256xf32>
    %c0_19 = arith.constant 0 : index
    %c0_20 = arith.constant 0 : index
    %33 = vector.load %arg7[%c0_19, %c0_20] : memref<32x1xf32, #tpu.memory_space<vmem>>, vector<32x1xf32>
    %34 = vector.broadcast %33 : vector<32x1xf32> to vector<32x256xf32>
    %35 = arith.addf %32, %34 : vector<32x256xf32>
    %cst_21 = arith.constant 0.000000e+00 : f32
    %36 = vector.broadcast %cst_21 : f32 to vector<32x256xf32>
    %37 = arith.maximumf %35, %36 : vector<32x256xf32>
    %c0_22 = arith.constant 0 : index
    %c0_23 = arith.constant 0 : index
    %c0_24 = arith.constant 0 : index
    %38 = vector.load %arg9[%c0_22, %c0_23, %c0_24] : memref<1x32x256xf32, #tpu.memory_space<vmem>>, vector<1x32x256xf32>
    %39 = vector.shape_cast %38 : vector<1x32x256xf32> to vector<32x256xf32>
    %40 = vector.shape_cast %37 : vector<32x256xf32> to vector<1x32x256xf32>
    tpu.vector_store %arg9[%c0_22, %c0_23, %c0_24], %40 {strides = array<i32>} : memref<1x32x256xf32, #tpu.memory_space<vmem>>, vector<1x32x256xf32>,
    return
  }
  func.func @transform_0(%arg0: i32) -> (i32, i32, i32) {
    %c0_i32 = arith.constant 0 : i32
    %c0_i32_0 = arith.constant 0 : i32
    %c0_i32_1 = arith.constant 0 : i32
    return %arg0, %c0_i32, %c0_i32_0 : i32, i32, i32
  }
  func.func @transform_1(%arg0: i32) -> (i32, i32) {
    %c0_i32 = arith.constant 0 : i32
    %c0_i32_0 = arith.constant 0 : i32
    %c0_i32_1 = arith.constant 0 : i32
    return %c0_i32, %c0_i32_0 : i32, i32
  }
  func.func @transform_2(%arg0: i32) -> (i32, i32) {
    %c0_i32 = arith.constant 0 : i32
    %c0_i32_0 = arith.constant 0 : i32
    %c0_i32_1 = arith.constant 0 : i32
    return %c0_i32, %c0_i32_0 : i32, i32
  }
  func.func @transform_3(%arg0: i32) -> (i32, i32) {
    %c0_i32 = arith.constant 0 : i32
    %c0_i32_0 = arith.constant 0 : i32
    %c0_i32_1 = arith.constant 0 : i32
    return %c0_i32, %c0_i32_0 : i32, i32
  }
  func.func @transform_4(%arg0: i32) -> (i32, i32) {
    %c0_i32 = arith.constant 0 : i32
    %c0_i32_0 = arith.constant 0 : i32
    %c0_i32_1 = arith.constant 0 : i32
    return %c0_i32, %c0_i32_0 : i32, i32
  }
  func.func @transform_5(%arg0: i32) -> (i32, i32) {
    %c0_i32 = arith.constant 0 : i32
    %c0_i32_0 = arith.constant 0 : i32
    %c0_i32_1 = arith.constant 0 : i32
    return %c0_i32, %c0_i32_0 : i32, i32
  }
  func.func @transform_6(%arg0: i32) -> (i32, i32) {
    %c0_i32 = arith.constant 0 : i32
    %c0_i32_0 = arith.constant 0 : i32
    %c0_i32_1 = arith.constant 0 : i32
    return %c0_i32, %c0_i32_0 : i32, i32
  }
  func.func @transform_7(%arg0: i32) -> (i32, i32) {
    %c0_i32 = arith.constant 0 : i32
    %c0_i32_0 = arith.constant 0 : i32
    %c0_i32_1 = arith.constant 0 : i32
    return %c0_i32, %c0_i32_0 : i32, i32
  }
  func.func @transform_8(%arg0: i32) -> (i32, i32, i32) {
    %c0_i32 = arith.constant 0 : i32
    %c0_i32_0 = arith.constant 0 : i32
    %c0_i32_1 = arith.constant 0 : i32
    return %arg0, %c0_i32, %c0_i32_0 : i32, i32, i32
  }
}

</mosaic_0001>

<llo_original>
// kernel: tpu_custom_call.1
$region0: #{tpu_custom_call.1}
  #allocation0 [shape = 'u32[]', space=smem, size = 0x4, offset = 0x4, fixed_abs, tag = 'smem constant byte address 0x4 - core index']
  #allocation1 [shape = 'u32[144,128]{1,0:T(1,128)}', space=vmem, size = 0x12000, scoped, tag = 'internal scratch']
  %s0 = inlined_call_operand.vmem [shape: bf16[2,16,256], index: 0, kind: input, shape index: {}]
  %s1 = inlined_call_operand.vmem [shape: bf16[4,16], index: 1, kind: input, shape index: {}]
  %s2 = inlined_call_operand.vmem [shape: f32[4,1], index: 2, kind: input, shape index: {}]
  %s3 = inlined_call_operand.vmem [shape: bf16[16,16], index: 3, kind: input, shape index: {}]
  %s4 = inlined_call_operand.vmem [shape: f32[16,1], index: 4, kind: input, shape index: {}]
  %s5 = inlined_call_operand.vmem [shape: bf16[32,16], index: 5, kind: input, shape index: {}]
  %s6 = inlined_call_operand.vmem [shape: f32[32,1], index: 6, kind: input, shape index: {}]
  %s7 = inlined_call_operand.vmem [shape: f32[2,256], index: 7, kind: input, shape index: {}]
  %s8 = inlined_call_operand.hbm [shape: f32[2,32,256], index: 8, kind: output, shape index: {}]
  %s9 = sld [smem:[#allocation0]]
  $region65: #{tpu_custom_call.1} parent=0
    _
  %s11 = ssub.s32 1, %s9
  %s12 = scalar_select 0, %s11, %s9
  $region1: #{tpu_custom_call.1} parent=0
    #allocation2 [shape = 'u8[65536]{0}', space=vmem, size = 0x10000, scoped, tag = 'output window, operand 0']
    #allocation3 [shape = 's32[2]{0}', space=sflag, size = 0x8, scoped, tag = 'scoped memory for tpu_custom_call.1']
    %13 = vsyncpa [#allocation3], 0
    %s14 = scalar_lea.sflag [#allocation3], 1
    %15 = vsyncpa %s14, 0
    loop: start=0, step=1, limit=4
    $region2: #{tpu_custom_call.1} parent=1 // loop_pre_header
      _
    $region3: #{tpu_custom_call.1} parent=1 // loop_header
      %s17 = sphi 0, %s21
      %p18 = scmp.ge.s32.totalorder %s17, 4
      %s27 = sphi 0, %s29
      %s30 = sphi 0, %s27
      %s31 = sphi 0, %s30
      %s47 = sphi 0, %s31
      %s51 = sphi 0, %s51
      %s53 = sphi 0, %s51
      %s54 = sphi 0, %s53
      %s68 = sphi 0, %s54
      %s72 = sphi 0, %s72
      %s74 = sphi 0, %s72
      %s75 = sphi 0, %s74
      %s89 = sphi 0, %s75
      %s93 = sphi 0, %s93
      %s95 = sphi 0, %s93
      %s96 = sphi 0, %s95
      %s110 = sphi 0, %s96
      %s114 = sphi 0, %s114
      %s116 = sphi 0, %s114
      %s117 = sphi 0, %s116
      %s131 = sphi 0, %s117
      %s135 = sphi 0, %s135
      %s137 = sphi 0, %s135
      %s138 = sphi 0, %s137
      %s152 = sphi 0, %s138
      %s156 = sphi 0, %s156
      %s158 = sphi 0, %s156
      %s159 = sphi 0, %s158
      %s173 = sphi 0, %s159
      %s177 = sphi 0, %s177
      %s179 = sphi 0, %s177
      %s180 = sphi 0, %s179
      %s194 = sphi 0, %s180
      %s200 = sphi 0, %s202
      %s203 = sphi 0, %s200
      %s204 = sphi 0, %s203
      %s220 = sphi 0, %s204
    $region4: #{tpu_custom_call.1} parent=1 // loop_header_branch
      %20 = sbr.rel (%p18) target = $region8
    $region5: #{tpu_custom_call.1} parent=1 // loop_body
      %s22 = ssub.s32 %s17, 1
      %s23 = ssub.s32 %s17, 2
      %s24 = sadd.s32 %s17, 1
      %s25 = ssub.s32 %s17, %s24
      %p26 = scmp.eq.s32.totalorder %s25, 0
      %s28 = sadd.s32 %s27, 1
      %s29 = scalar_select %p26, %s27, %s28
      %p32 = pneg %p26
      %p33 = scmp.eq.s32.totalorder %s17, 1
      %p34 = por %p32, %p33
      %p35 = scmp.ne.s32.totalorder %s27, %s30
      %p36 = scmp.eq.s32.totalorder %s17, 0
      %p37 = por %p35, %p36
      %p38 = scmp.ne.s32.totalorder %s27, %s30
      %p39 = scmp.eq.s32.totalorder %s22, 1
      %p40 = por %p38, %p39
      %p41 = scmp.ne.s32.totalorder %s30, %s31
      %p42 = scmp.eq.s32.totalorder %s22, 0
      %p43 = por %p41, %p42
      %p44 = scmp.ne.s32.totalorder %s30, %s31
      %p45 = scmp.eq.s32.totalorder %s23, 1
      %p46 = por %p44, %p45
      %p48 = scmp.ne.s32.totalorder %s31, %s47
      %p49 = scmp.eq.s32.totalorder %s23, 0
      %p50 = por %p48, %p49
      %s52 = sadd.s32 %s51, 1
      %p55 = scmp.eq.s32.totalorder %s17, 1
      %p56 = scmp.ne.s32.totalorder %s51, %s53
      %p57 = scmp.eq.s32.totalorder %s17, 0
      %p58 = por %p56, %p57
      %p59 = scmp.ne.s32.totalorder %s51, %s53
      %p60 = scmp.eq.s32.totalorder %s22, 1
      %p61 = por %p59, %p60
      %p62 = scmp.ne.s32.totalorder %s53, %s54
      %p63 = scmp.eq.s32.totalorder %s22, 0
      %p64 = por %p62, %p63
      %p65 = scmp.ne.s32.totalorder %s53, %s54
      %p66 = scmp.eq.s32.totalorder %s23, 1
      %p67 = por %p65, %p66
      %p69 = scmp.ne.s32.totalorder %s54, %s68
      %p70 = scmp.eq.s32.totalorder %s23, 0
      %p71 = por %p69, %p70
      %s73 = sadd.s32 %s72, 1
      %p76 = scmp.eq.s32.totalorder %s17, 1
      %p77 = scmp.ne.s32.totalorder %s72, %s74
      %p78 = scmp.eq.s32.totalorder %s17, 0
      %p79 = por %p77, %p78
      %p80 = scmp.ne.s32.totalorder %s72, %s74
      %p81 = scmp.eq.s32.totalorder %s22, 1
      %p82 = por %p80, %p81
      %p83 = scmp.ne.s32.totalorder %s74, %s75
      %p84 = scmp.eq.s32.totalorder %s22, 0
      %p85 = por %p83, %p84
      %p86 = scmp.ne.s32.totalorder %s74, %s75
      %p87 = scmp.eq.s32.totalorder %s23, 1
      %p88 = por %p86, %p87
      %p90 = scmp.ne.s32.totalorder %s75, %s89
      %p91 = scmp.eq.s32.totalorder %s23, 0
      %p92 = por %p90, %p91
      %s94 = sadd.s32 %s93, 1
      %p97 = scmp.eq.s32.totalorder %s17, 1
      %p98 = scmp.ne.s32.totalorder %s93, %s95
      %p99 = scmp.eq.s32.totalorder %s17, 0
      %p100 = por %p98, %p99
      %p101 = scmp.ne.s32.totalorder %s93, %s95
      %p102 = scmp.eq.s32.totalorder %s22, 1
      %p103 = por %p101, %p102
      %p104 = scmp.ne.s32.totalorder %s95, %s96
      %p105 = scmp.eq.s32.totalorder %s22, 0
      %p106 = por %p104, %p105
      %p107 = scmp.ne.s32.totalorder %s95, %s96
      %p108 = scmp.eq.s32.totalorder %s23, 1
      %p109 = por %p107, %p108
      %p111 = scmp.ne.s32.totalorder %s96, %s110
      %p112 = scmp.eq.s32.totalorder %s23, 0
      %p113 = por %p111, %p112
      %s115 = sadd.s32 %s114, 1
      %p118 = scmp.eq.s32.totalorder %s17, 1
      %p119 = scmp.ne.s32.totalorder %s114, %s116
      %p120 = scmp.eq.s32.totalorder %s17, 0
      %p121 = por %p119, %p120
      %p122 = scmp.ne.s32.totalorder %s114, %s116
      %p123 = scmp.eq.s32.totalorder %s22, 1
      %p124 = por %p122, %p123
      %p125 = scmp.ne.s32.totalorder %s116, %s117
      %p126 = scmp.eq.s32.totalorder %s22, 0
      %p127 = por %p125, %p126
      %p128 = scmp.ne.s32.totalorder %s116, %s117
      %p129 = scmp.eq.s32.totalorder %s23, 1
      %p130 = por %p128, %p129
      %p132 = scmp.ne.s32.totalorder %s117, %s131
      %p133 = scmp.eq.s32.totalorder %s23, 0
      %p134 = por %p132, %p133
      %s136 = sadd.s32 %s135, 1
      %p139 = scmp.eq.s32.totalorder %s17, 1
      %p140 = scmp.ne.s32.totalorder %s135, %s137
      %p141 = scmp.eq.s32.totalorder %s17, 0
      %p142 = por %p140, %p141
      %p143 = scmp.ne.s32.totalorder %s135, %s137
      %p144 = scmp.eq.s32.totalorder %s22, 1
      %p145 = por %p143, %p144
      %p146 = scmp.ne.s32.totalorder %s137, %s138
      %p147 = scmp.eq.s32.totalorder %s22, 0
      %p148 = por %p146, %p147
      %p149 = scmp.ne.s32.totalorder %s137, %s138
      %p150 = scmp.eq.s32.totalorder %s23, 1
      %p151 = por %p149, %p150
      %p153 = scmp.ne.s32.totalorder %s138, %s152
      %p154 = scmp.eq.s32.totalorder %s23, 0
      %p155 = por %p153, %p154
      %s157 = sadd.s32 %s156, 1
      %p160 = scmp.eq.s32.totalorder %s17, 1
      %p161 = scmp.ne.s32.totalorder %s156, %s158
      %p162 = scmp.eq.s32.totalorder %s17, 0
      %p163 = por %p161, %p162
      %p164 = scmp.ne.s32.totalorder %s156, %s158
      %p165 = scmp.eq.s32.totalorder %s22, 1
      %p166 = por %p164, %p165
      %p167 = scmp.ne.s32.totalorder %s158, %s159
      %p168 = scmp.eq.s32.totalorder %s22, 0
      %p169 = por %p167, %p168
      %p170 = scmp.ne.s32.totalorder %s158, %s159
      %p171 = scmp.eq.s32.totalorder %s23, 1
      %p172 = por %p170, %p171
      %p174 = scmp.ne.s32.totalorder %s159, %s173
      %p175 = scmp.eq.s32.totalorder %s23, 0
      %p176 = por %p174, %p175
      %s178 = sadd.s32 %s177, 1
      %p181 = scmp.eq.s32.totalorder %s17, 1
      %p182 = scmp.ne.s32.totalorder %s177, %s179
      %p183 = scmp.eq.s32.totalorder %s17, 0
      %p184 = por %p182, %p183
      %p185 = scmp.ne.s32.totalorder %s177, %s179
      %p186 = scmp.eq.s32.totalorder %s22, 1
      %p187 = por %p185, %p186
      %p188 = scmp.ne.s32.totalorder %s179, %s180
      %p189 = scmp.eq.s32.totalorder %s22, 0
      %p190 = por %p188, %p189
      %p191 = scmp.ne.s32.totalorder %s179, %s180
      %p192 = scmp.eq.s32.totalorder %s23, 1
      %p193 = por %p191, %p192
      %p195 = scmp.ne.s32.totalorder %s180, %s194
      %p196 = scmp.eq.s32.totalorder %s23, 0
      %p197 = por %p195, %p196
      %s198 = ssub.s32 %s17, %s24
      %p199 = scmp.eq.s32.totalorder %s198, 0
      %s201 = sadd.s32 %s200, 1
      %s202 = scalar_select %p199, %s200, %s201
      %p205 = pneg %p199
      %p206 = scmp.eq.s32.totalorder %s17, 1
      %p207 = por %p205, %p206
      %p208 = scmp.ne.s32.totalorder %s200, %s203
      %p209 = scmp.eq.s32.totalorder %s17, 0
      %p210 = por %p208, %p209
      %p211 = scmp.ne.s32.totalorder %s200, %s203
      %p212 = scmp.eq.s32.totalorder %s22, 1
      %p213 = por %p211, %p212
      %p214 = scmp.ne.s32.totalorder %s203, %s204
      %p215 = scmp.eq.s32.totalorder %s22, 0
      %p216 = por %p214, %p215
      %p217 = scmp.ne.s32.totalorder %s203, %s204
      %p218 = scmp.eq.s32.totalorder %s23, 1
      %p219 = por %p217, %p218
      %p221 = scmp.ne.s32.totalorder %s204, %s220
      %p222 = scmp.eq.s32.totalorder %s23, 0
      %p223 = por %p221, %p222
      %p224 = scmp.le.s32.totalorder 1, %s17
      %p225 = scmp.lt.s32.totalorder %s17, 3
      %p226 = pnand %p224, %p225
      %p227 = pneg %p226
      // Predicated region
      $region9: #{tpu_custom_call.1} parent=5 // pred_check
        _
      $region10: #{tpu_custom_call.1} parent=5 // pred_check_branch
        %229 = sbr.rel (%p226) target = $region12
      $region11: #{tpu_custom_call.1} parent=5 // pred_region
        %s230 = ssub.s32 %s17, 1
        // Predicated region
        $region13: #{tpu_custom_call.1} parent=11 // pred_check
          %p231 = pneg %p64
        $region14: #{tpu_custom_call.1} parent=11 // pred_check_branch
          %233 = sbr.rel (%p231) target = $region16
        $region15: #{tpu_custom_call.1} parent=11 // pred_region
          _
        $region16: #{tpu_custom_call.1} parent=11 // pred_fallthru
          _
        // Predicated region
        $region17: #{tpu_custom_call.1} parent=11 // pred_check
          %p234 = pneg %p85
        $region18: #{tpu_custom_call.1} parent=11 // pred_check_branch
          %236 = sbr.rel (%p234) target = $region20
        $region19: #{tpu_custom_call.1} parent=11 // pred_region
          _
        $region20: #{tpu_custom_call.1} parent=11 // pred_fallthru
          _
        // Predicated region
        $region21: #{tpu_custom_call.1} parent=11 // pred_check
          %p237 = pneg %p106
        $region22: #{tpu_custom_call.1} parent=11 // pred_check_branch
          %239 = sbr.rel (%p237) target = $region24
        $region23: #{tpu_custom_call.1} parent=11 // pred_region
          _
        $region24: #{tpu_custom_call.1} parent=11 // pred_fallthru
          _
        // Predicated region
        $region25: #{tpu_custom_call.1} parent=11 // pred_check
          %p240 = pneg %p127
        $region26: #{tpu_custom_call.1} parent=11 // pred_check_branch
          %242 = sbr.rel (%p240) target = $region28
        $region27: #{tpu_custom_call.1} parent=11 // pred_region
          _
        $region28: #{tpu_custom_call.1} parent=11 // pred_fallthru
          _
        // Predicated region
        $region29: #{tpu_custom_call.1} parent=11 // pred_check
          %p243 = pneg %p148
        $region30: #{tpu_custom_call.1} parent=11 // pred_check_branch
          %245 = sbr.rel (%p243) target = $region32
        $region31: #{tpu_custom_call.1} parent=11 // pred_region
          _
        $region32: #{tpu_custom_call.1} parent=11 // pred_fallthru
          _
        // Predicated region
        $region33: #{tpu_custom_call.1} parent=11 // pred_check
          %p246 = pneg %p169
        $region34: #{tpu_custom_call.1} parent=11 // pred_check_branch
          %248 = sbr.rel (%p246) target = $region36
        $region35: #{tpu_custom_call.1} parent=11 // pred_region
          _
        $region36: #{tpu_custom_call.1} parent=11 // pred_fallthru
          _
        // Predicated region
        $region37: #{tpu_custom_call.1} parent=11 // pred_check
          %p249 = pneg %p190
        $region38: #{tpu_custom_call.1} parent=11 // pred_check_branch
          %251 = sbr.rel (%p249) target = $region40
        $region39: #{tpu_custom_call.1} parent=11 // pred_region
          _
        $region40: #{tpu_custom_call.1} parent=11 // pred_fallthru
          _
      $region12: #{tpu_custom_call.1} parent=5 // pred_fallthru
        _
      %p252 = scmp.lt.s32.totalorder %s17, 2
      // Predicated region
      $region41: #{tpu_custom_call.1} parent=5 // pred_check
        %p253 = pneg %p252
      $region42: #{tpu_custom_call.1} parent=5 // pred_check_branch
        %255 = sbr.rel (%p253) target = $region44
      $region43: #{tpu_custom_call.1} parent=5 // pred_region
        // Predicated region
        $region45: #{tpu_custom_call.1} parent=43 // pred_check
          %p256 = pneg %p37
        $region46: #{tpu_custom_call.1} parent=43 // pred_check_branch
          %258 = sbr.rel (%p256) target = $region48
        $region47: #{tpu_custom_call.1} parent=43 // pred_region
          %p259 = scmp.lt.s32.totalorder %s17, 1
          %s260 = scalar_select %p259, %s17, 1
          %s261 = smul.addr %s260, 4
          %s262 = smul.addr %s261, 4
          %s263 = scalar_lea.vmem %s0, %s262
        $region48: #{tpu_custom_call.1} parent=43 // pred_fallthru
          _
      $region44: #{tpu_custom_call.1} parent=5 // pred_fallthru
        _
      %p264 = scmp.le.s32.totalorder 1, %s17
      %p265 = scmp.lt.s32.totalorder %s17, 3
      %p266 = pnand %p264, %p265
      %p267 = pneg %p266
      // Predicated region
      $region49: #{tpu_custom_call.1} parent=5 // pred_check
        _
      $region50: #{tpu_custom_call.1} parent=5 // pred_check_branch
        %269 = sbr.rel (%p266) target = $region52
      $region51: #{tpu_custom_call.1} parent=5 // pred_region
        %s270 = ssub.s32 %s17, 1
        %p271 = scmp.lt.s32.totalorder %s22, 1
        %s272 = scalar_select %p271, %s22, 1
        %s273 = smul.addr %s272, 4
        %s274 = smul.addr %s273, 4
        %s275 = scalar_lea.vmem %s0, %s274
        %p276 = pneg %p43
        %p277 = pneg %p40
        %p278 = pneg %p64
        %p279 = pneg %p61
        %p280 = pneg %p85
        %p281 = pneg %p82
        %p282 = pneg %p106
        %p283 = pneg %p103
        %p284 = pneg %p127
        %p285 = pneg %p124
        %p286 = pneg %p148
        %p287 = pneg %p145
        %p288 = pneg %p169
        %p289 = pneg %p166
        %p290 = pneg %p190
        %p291 = pneg %p187
        %p292 = pneg %p216
        %p293 = pneg %p213
        %s294 = sand.u32 %s203, 1
        %s295 = scalar_lea.sflag [#allocation3], %s294
        %s296 = sand.u32 %s203, 1
        %s297 = smul.addr %s296, 64
        %s298 = scalar_lea.vmem [#allocation2], %s297
        %p299 = scmp.lt.s32.totalorder %s22, 1
        %s300 = scalar_select %p299, %s22, 1
        %s301 = smul.addr %s300, 4
        %s302 = smul.addr %s301, 4
        %s303 = scalar_lea.vmem %s0, %s302
        %v305 = vld [vmem:[%s1] sm:$0x3]
        %v306 = vld [vmem:[%s303] sm:$0xff]
        %v307 = vld [vmem:[%s303 + $0x8] sm:$0xff]
        %v308 = vld [vmem:[%s2] sm:$0xf]
        %310 = vset.pattern.permute.xlu0 0
        %311 = vperm.xlu0 %310, %v308
        %v312 = vpop.permute.xlu0 %311
        %v316 = vunpack.c.l.b16 %v306
        %v317 = vunpack.c.h.b16 %v306
        %v318 = vunpack.c.l.b16 %v307
        %v319 = vunpack.c.h.b16 %v307
        %v320 = vpack.c.b16 %v318, %v316
        %v321 = vpack.c.b16 %v319, %v317
        %vm324 = vcmask 130048
        %v326 = vsel %vm324, %v305, 0
        %328 = vmatprep.subr.bf16.mxu0 %v321
        %329 = vmatpush1.bf16.msra.mxu0 %v320
        %330 = vmatprep.subr.bf16.mxu0 0
        %331 = vmatpush1.bf16.msra.mxu0 0
        %332 = vmatprep.subr.bf16.mxu0 0
        %333 = vmatpush1.bf16.msra.mxu0 0
        %334 = vmatprep.subr.bf16.mxu0 0
        %335 = vmatpush1.bf16.msra.mxu0 0
        %336 = vmatprep.subr.bf16.mxu0 0
        %337 = vmatpush1.bf16.msra.mxu0 0
        %338 = vmatprep.subr.bf16.mxu0 0
        %339 = vmatpush1.bf16.msra.mxu0 0
        %340 = vmatprep.subr.bf16.mxu0 0
        %341 = vmatpush1.bf16.msra.mxu0 0
        %342 = vmatprep.subr.bf16.mxu0 0
        %343 = vmatpush1.bf16.msra.mxu0 0
        %344 = vmatprep.subr.bf16.mxu0 0
        %345 = vmatpush1.bf16.msra.mxu0 0
        %346 = vmatprep.subr.bf16.mxu0 0
        %347 = vmatpush1.bf16.msra.mxu0 0
        %348 = vmatprep.subr.bf16.mxu0 0
        %349 = vmatpush1.bf16.msra.mxu0 0
        %350 = vmatprep.subr.bf16.mxu0 0
        %351 = vmatpush1.bf16.msra.mxu0 0
        %352 = vmatprep.subr.bf16.mxu0 0
        %353 = vmatpush1.bf16.msra.mxu0 0
        %354 = vmatprep.subr.bf16.mxu0 0
        %355 = vmatpush1.bf16.msra.mxu0 0
        %356 = vmatprep.subr.bf16.mxu0 0
        %357 = vmatpush1.bf16.msra.mxu0 0
        %358 = vmatprep.subr.bf16.mxu0 0
        %359 = vmatpush1.bf16.msra.mxu0 0
        %360 = vmatprep.mubr.bf16.mxu0 0
        %361 = vmatmul.mubr.bf16.gmra.mrb[0].mxu0 %v326
        %v362 = vpop.f32.mrb[0].mxu0
        %v363 = vadd.f32 %v312, %v362
        %v364 = vpop.f32.mrb[0].mxu0
        %v365 = vadd.f32 %v312, %v364
        %v366 = vpop.f32.mrb[0].mxu0
        %v367 = vpop.f32.mrb[0].mxu0
        %368 = vdwg.mxu0
        %v369 = vmax.f32 %v363, 0.0
        %v370 = vmax.f32 %v365, 0.0
        %v371 = vld [vmem:[%s7] ss:$2 sm:$0x3]
        %s372 = scalar_lea.vmem %s7, 1
        %v373 = vld [vmem:[%s372] ss:$2 sm:$0x3]
        %374 = vrot.lane.b32.xlu0 %v369, 112
        %v375 = vpop.permute.xlu0 %374
        %376 = vrot.lane.b32.xlu0 %v370, 112
        %v377 = vpop.permute.xlu0 %376
        %v378 = vlaneseq
        %v379 = vand.u32 %v378, 127
        %vm380 = vcmp.lt.s32.totalorder %v379, 112
        %v381 = vsel %vm380, %v375, %v377
        %v382 = vsel %vm380, %v377, %v375
        %v384 = vlaneseq
        %v385 = vshrl.u32 %v384, 7
        %v386 = vsub.s32 0, %v385
        %v387 = vrot.slane %v373, %v386
        %v388 = vlaneseq
        %v389 = vshrl.u32 %v388, 7
        %v390 = vsub.s32 1, %v389
        %v391 = vrot.slane %v373, %v390
        %v394 = vmul.f32 %v381, %v387
        %v395 = vmul.f32 %v382, %v391
        %396 = vrot.lane.b32.xlu0 %v369, 127
        %v397 = vpop.permute.xlu0 %396
        %398 = vrot.lane.b32.xlu0 %v370, 127
        %v399 = vpop.permute.xlu0 %398
        %vm400 = vcmp.lt.s32.totalorder %v379, 127
        %v401 = vsel %vm400, %v397, %v399
        %v402 = vsel %vm400, %v399, %v397
        %v404 = vlaneseq
        %v405 = vshrl.u32 %v404, 7
        %v406 = vsub.s32 0, %v405
        %v407 = vrot.slane %v371, %v406
        %v408 = vlaneseq
        %v409 = vshrl.u32 %v408, 7
        %v410 = vsub.s32 1, %v409
        %v411 = vrot.slane %v371, %v410
        %v414 = vmul.f32 %v401, %v407
        %v415 = vmul.f32 %v402, %v411
        %416 = vrot.lane.b32.xlu0 %v369, 111
        %v417 = vpop.permute.xlu0 %416
        %418 = vrot.lane.b32.xlu0 %v370, 111
        %v419 = vpop.permute.xlu0 %418
        %vm420 = vcmp.lt.s32.totalorder %v379, 111
        %v421 = vsel %vm420, %v417, %v419
        %v422 = vsel %vm420, %v419, %v417
        %v423 = vmul.f32 %v371, %v373
        %v425 = vlaneseq
        %v426 = vshrl.u32 %v425, 7
        %v427 = vsub.s32 0, %v426
        %v428 = vrot.slane %v423, %v427
        %v429 = vlaneseq
        %v430 = vshrl.u32 %v429, 7
        %v431 = vsub.s32 1, %v430
        %v432 = vrot.slane %v423, %v431
        %v435 = vmul.f32 %v421, %v428
        %v436 = vmul.f32 %v422, %v432
        %v439 = vrot.slane %v394, 4
        %v440 = vrot.slane %v395, 4
        %v445 = vrot.slane %v435, 4
        %v446 = vrot.slane %v436, 4
        %vm449 = vcmask 1043456
        %v450 = vsel %vm449, %v369, %v439
        %v451 = vsel %vm449, %v370, %v440
        %v452 = vsel %vm449, %v414, %v445
        %v453 = vsel %vm449, %v415, %v446
        %v454 = vpack.c.bf16 %v452, %v450
        %v455 = vpack.c.bf16 %v453, %v451
        %v456 = vld [vmem:[%s3] sm:$0xf]
        %v457 = vld [vmem:[%s3 + $0x4] sm:$0xf]
        %v458 = vld [vmem:[%s4] sm:$0xff]
        %v459 = vld [vmem:[%s4 + $0x8] sm:$0xff]
        %461 = vset.pattern.permute.xlu0 0
        %462 = vperm.xlu0 %461, %v458
        %v463 = vpop.permute.xlu0 %462
        %466 = vset.pattern.permute.xlu0 0
        %467 = vperm.xlu0 %466, %v459
        %v468 = vpop.permute.xlu0 %467
        %v472 = vunpack.c.l.b16 %v456
        %v473 = vunpack.c.l.b16 %v457
        %v474 = vpack.c.b16 %v473, %v472
        %v476 = vsel %vm324, %v474, 0
        %478 = vmatprep.subr.bf16.mxu0 %v455
        %479 = vmatpush1.bf16.msra.mxu0 %v454
        %480 = vmatprep.subr.bf16.mxu0 0
        %481 = vmatpush1.bf16.msra.mxu0 0
        %482 = vmatprep.subr.bf16.mxu0 0
        %483 = vmatpush1.bf16.msra.mxu0 0
        %484 = vmatprep.subr.bf16.mxu0 0
        %485 = vmatpush1.bf16.msra.mxu0 0
        %486 = vmatprep.subr.bf16.mxu0 0
        %487 = vmatpush1.bf16.msra.mxu0 0
        %488 = vmatprep.subr.bf16.mxu0 0
        %489 = vmatpush1.bf16.msra.mxu0 0
        %490 = vmatprep.subr.bf16.mxu0 0
        %491 = vmatpush1.bf16.msra.mxu0 0
        %492 = vmatprep.subr.bf16.mxu0 0
        %493 = vmatpush1.bf16.msra.mxu0 0
        %494 = vmatprep.subr.bf16.mxu0 0
        %495 = vmatpush1.bf16.msra.mxu0 0
        %496 = vmatprep.subr.bf16.mxu0 0
        %497 = vmatpush1.bf16.msra.mxu0 0
        %498 = vmatprep.subr.bf16.mxu0 0
        %499 = vmatpush1.bf16.msra.mxu0 0
        %500 = vmatprep.subr.bf16.mxu0 0
        %501 = vmatpush1.bf16.msra.mxu0 0
        %502 = vmatprep.subr.bf16.mxu0 0
        %503 = vmatpush1.bf16.msra.mxu0 0
        %504 = vmatprep.subr.bf16.mxu0 0
        %505 = vmatpush1.bf16.msra.mxu0 0
        %506 = vmatprep.subr.bf16.mxu0 0
        %507 = vmatpush1.bf16.msra.mxu0 0
        %508 = vmatprep.subr.bf16.mxu0 0
        %509 = vmatpush1.bf16.msra.mxu0 0
        %510 = vmatprep.mubr.bf16.mxu0 0
        %511 = vmatmul.mubr.bf16.gmra.mrb[0].mxu0 %v476
        %v512 = vpop.f32.mrb[0].mxu0
        %v513 = vadd.f32 %v463, %v512
        %v514 = vpop.f32.mrb[0].mxu0
        %v515 = vadd.f32 %v463, %v514
        %v516 = vpop.f32.mrb[0].mxu0
        %v517 = vadd.f32 %v468, %v516
        %v518 = vpop.f32.mrb[0].mxu0
        %v519 = vadd.f32 %v468, %v518
        %520 = vdwg.mxu0
        %v521 = vmax.f32 %v513, 0.0
        %v522 = vmax.f32 %v515, 0.0
        %v523 = vmax.f32 %v517, 0.0
        %v524 = vmax.f32 %v519, 0.0
        %v525 = vld [vmem:[%s5] sm:$0xf]
        %v526 = vld [vmem:[%s5 + $0x4] sm:$0xf]
        %v527 = vld [vmem:[%s5 + $0x8] sm:$0xf]
        %v528 = vld [vmem:[%s5 + $0xc] sm:$0xf]
        %v529 = vpack.c.bf16 %v523, %v521
        %v530 = vpack.c.bf16 %v524, %v522
        %v531 = vld [vmem:[%s6] sm:$0xff]
        %v532 = vld [vmem:[%s6 + $0x8] sm:$0xff]
        %v533 = vld [vmem:[%s6 + $0x10] sm:$0xff]
        %v534 = vld [vmem:[%s6 + $0x18] sm:$0xff]
        %536 = vset.pattern.permute.xlu0 0
        %537 = vperm.xlu0 %536, %v531
        %v538 = vpop.permute.xlu0 %537
        %541 = vset.pattern.permute.xlu0 0
        %542 = vperm.xlu0 %541, %v532
        %v543 = vpop.permute.xlu0 %542
        %546 = vset.pattern.permute.xlu0 0
        %547 = vperm.xlu0 %546, %v533
        %v548 = vpop.permute.xlu0 %547
        %551 = vset.pattern.permute.xlu0 0
        %552 = vperm.xlu0 %551, %v534
        %v553 = vpop.permute.xlu0 %552
        %v559 = vunpack.c.l.b16 %v525
        %v560 = vunpack.c.l.b16 %v526
        %v561 = vunpack.c.l.b16 %v527
        %v562 = vunpack.c.l.b16 %v528
        %v563 = vpack.c.b16 %v560, %v559
        %v564 = vpack.c.b16 %v562, %v561
        %v566 = vsel %vm324, %v563, 0
        %v569 = vsel %vm324, %v564, 0
        %571 = vmatprep.subr.bf16.mxu0 %v530
        %572 = vmatpush1.bf16.msra.mxu0 %v529
        %573 = vmatprep.subr.bf16.mxu0 0
        %574 = vmatpush1.bf16.msra.mxu0 0
        %575 = vmatprep.subr.bf16.mxu0 0
        %576 = vmatpush1.bf16.msra.mxu0 0
        %577 = vmatprep.subr.bf16.mxu0 0
        %578 = vmatpush1.bf16.msra.mxu0 0
        %579 = vmatprep.subr.bf16.mxu0 0
        %580 = vmatpush1.bf16.msra.mxu0 0
        %581 = vmatprep.subr.bf16.mxu0 0
        %582 = vmatpush1.bf16.msra.mxu0 0
        %583 = vmatprep.subr.bf16.mxu0 0
        %584 = vmatpush1.bf16.msra.mxu0 0
        %585 = vmatprep.subr.bf16.mxu0 0
        %586 = vmatpush1.bf16.msra.mxu0 0
        %587 = vmatprep.subr.bf16.mxu0 0
        %588 = vmatpush1.bf16.msra.mxu0 0
        %589 = vmatprep.subr.bf16.mxu0 0
        %590 = vmatpush1.bf16.msra.mxu0 0
        %591 = vmatprep.subr.bf16.mxu0 0
        %592 = vmatpush1.bf16.msra.mxu0 0
        %593 = vmatprep.subr.bf16.mxu0 0
        %594 = vmatpush1.bf16.msra.mxu0 0
        %595 = vmatprep.subr.bf16.mxu0 0
        %596 = vmatpush1.bf16.msra.mxu0 0
        %597 = vmatprep.subr.bf16.mxu0 0
        %598 = vmatpush1.bf16.msra.mxu0 0
        %599 = vmatprep.subr.bf16.mxu0 0
        %600 = vmatpush1.bf16.msra.mxu0 0
        %601 = vmatprep.subr.bf16.mxu0 0
        %602 = vmatpush1.bf16.msra.mxu0 0
        %603 = vmatprep.mubr.bf16.mxu0 0
        %604 = vmatmul.mubr.bf16.gmra.mrb[0].mxu0 %v566
        %v605 = vpop.f32.mrb[0].mxu0
        %v606 = vadd.f32 %v538, %v605
        %v607 = vpop.f32.mrb[0].mxu0
        %v608 = vadd.f32 %v538, %v607
        %v609 = vpop.f32.mrb[0].mxu0
        %v610 = vadd.f32 %v543, %v609
        %v611 = vpop.f32.mrb[0].mxu0
        %v612 = vadd.f32 %v543, %v611
        %613 = vmatprep.mubr.bf16.mxu0 0
        %614 = vmatmul.mubr.bf16.gmra.mrb[0].mxu0 %v569
        %v615 = vpop.f32.mrb[0].mxu0
        %v616 = vadd.f32 %v548, %v615
        %v617 = vpop.f32.mrb[0].mxu0
        %v618 = vadd.f32 %v548, %v617
        %v619 = vpop.f32.mrb[0].mxu0
        %v620 = vadd.f32 %v553, %v619
        %v621 = vpop.f32.mrb[0].mxu0
        %v622 = vadd.f32 %v553, %v621
        %623 = vdwg.mxu0
        %v624 = vmax.f32 %v606, 0.0
        %v625 = vmax.f32 %v608, 0.0
        %v626 = vmax.f32 %v610, 0.0
        %v627 = vmax.f32 %v612, 0.0
        %v628 = vmax.f32 %v616, 0.0
        %v629 = vmax.f32 %v618, 0.0
        %v630 = vmax.f32 %v620, 0.0
        %v631 = vmax.f32 %v622, 0.0
        %632 = vst [vmem:[%s298] sm:$0xff] %v624
        %633 = vst [vmem:[%s298 + $0x8] sm:$0xff] %v625
        %634 = vst [vmem:[%s298 + $0x10] sm:$0xff] %v626
        %635 = vst [vmem:[%s298 + $0x18] sm:$0xff] %v627
        %636 = vst [vmem:[%s298 + $0x20] sm:$0xff] %v628
        %637 = vst [vmem:[%s298 + $0x28] sm:$0xff] %v629
        %638 = vst [vmem:[%s298 + $0x30] sm:$0xff] %v630
        %639 = vst [vmem:[%s298 + $0x38] sm:$0xff] %v631
        %s640 = sand.u32 %s203, 1
        %s641 = scalar_lea.sflag [#allocation3], %s640
        %s642 = sand.u32 %s203, 1
        %s643 = smul.addr %s642, 64
        %s644 = scalar_lea.vmem [#allocation2], %s643
        // Predicated region
        $region53: #{tpu_custom_call.1} parent=51 // pred_check
          %p645 = pneg %p213
        $region54: #{tpu_custom_call.1} parent=51 // pred_check_branch
          %647 = sbr.rel (%p645) target = $region56
        $region55: #{tpu_custom_call.1} parent=51 // pred_region
          %s649 = ssub.s32 1024, 1024
          %650 = vsyncadd %s641, %s649
          %s651 = smul.addr %s22, 8
          %s652 = smul.addr %s651, 128
          %s653 = scalar_lea.hbm %s8, %s652
          %s654 = sshll.u32 %s644, 4
          %s655 = int_to_ptr.vmem [resolvable:$true] %s654
          %660 = dma.vmem_to_hbm [thread:$0]  %s655, 1024, %s653, %s641, 256, 256, 16
        $region56: #{tpu_custom_call.1} parent=51 // pred_fallthru
          _
      $region52: #{tpu_custom_call.1} parent=5 // pred_fallthru
        _
      %p661 = scmp.le.s32.totalorder 2, %s17
      // Predicated region
      $region57: #{tpu_custom_call.1} parent=5 // pred_check
        %p662 = pneg %p661
      $region58: #{tpu_custom_call.1} parent=5 // pred_check_branch
        %664 = sbr.rel (%p662) target = $region60
      $region59: #{tpu_custom_call.1} parent=5 // pred_region
        %s665 = ssub.s32 %s17, 2
        // Predicated region
        $region61: #{tpu_custom_call.1} parent=59 // pred_check
          %p666 = pneg %p219
        $region62: #{tpu_custom_call.1} parent=59 // pred_check_branch
          %668 = sbr.rel (%p666) target = $region64
        $region63: #{tpu_custom_call.1} parent=59 // pred_region
          %s669 = sand.u32 %s204, 1
          %s670 = scalar_lea.sflag [#allocation3], %s669
          %s671 = sand.u32 %s204, 1
          %s672 = smul.addr %s671, 64
          %s673 = scalar_lea.vmem [#allocation2], %s672
          %674 = dma.done %s670, 1024
        $region64: #{tpu_custom_call.1} parent=59 // pred_fallthru
          _
      $region60: #{tpu_custom_call.1} parent=5 // pred_fallthru
        _
    $region6: #{tpu_custom_call.1} parent=1 // loop_footer
      %s21 = sadd.s32 1, %s17
    $region7: #{tpu_custom_call.1} parent=1 // loop_footer_branch
      %16 = sbr.rel target = $region3
    $region8: #{tpu_custom_call.1} parent=1 // loop_exit
      _
    %675 = vsyncpa [#allocation3], 1
    %s676 = scalar_lea.sflag [#allocation3], 1
    %677 = vsyncpa %s676, 1

</llo_original>
